<compile_context>
chip_gen: v7x
topology: tpu7x:2x2x1
jax: 0.10.0
libtpu: 0.0.40
codegen_flags: <defaults>
</compile_context>

<pallas_src>
import functools
import math

import jax
import jax.numpy as jnp
from jax import lax
from jax.experimental import pallas as pl
from jax.experimental.pallas import tpu as pltpu


def _round_up(x: int, m: int) -> int:
    return ((x + m - 1) // m) * m


def _moe_gate_kernel(x_ref, w_ref, *out_refs, top_k: int, norm_topk_prob: bool,
                     n_experts: int, e_pad: int, pack_w: int, emit_scores: bool):
    # x_ref: (TILE_T, H) in native dtype; w_ref: (E, H) in native dtype.
    if emit_scores:
        scores_ref, pack_ref = out_refs
    else:
        (pack_ref,) = out_refs

    x = x_ref[...]
    w = w_ref[...]

    # logits = x @ W.T  -> (TILE_T, E), f32 accumulate on the MXU (no operand upcast).
    logits = lax.dot_general(
        x, w,
        dimension_numbers=(((1,), (1,)), ((), ())),
        preferred_element_type=jnp.float32,
    )

    # softmax over experts (f32); divide -> EUP reciprocal.
    m = jnp.max(logits, axis=-1, keepdims=True)
    e = jnp.exp(logits - m)
    denom = jnp.sum(e, axis=-1, keepdims=True)
    scores = e * pl.reciprocal(denom, approx=True)

    tile_t = scores.shape[0]

    if emit_scores:
        pad = e_pad - n_experts
        if pad > 0:
            scores_out = jnp.concatenate(
                [scores, jnp.zeros((tile_t, pad), jnp.float32)], axis=-1)
        else:
            scores_out = scores
        scores_ref[...] = scores_out  # lane-dense (multiple of 128) unmasked store

    # top-k via iterative (max, first-index-of-max, mask). k and E are tiny.
    eiota = lax.broadcasted_iota(jnp.int32, scores.shape, 1)
    s = scores
    vals, ids = [], []
    for _ in range(top_k):
        v = jnp.max(s, axis=-1, keepdims=True)                          # (T, 1)
        is_max = s >= v
        i = jnp.min(jnp.where(is_max, eiota, n_experts), axis=-1,
                    keepdims=True).astype(jnp.int32)                     # (T, 1)
        vals.append(v)
        ids.append(i)
        s = jnp.where(eiota == i, -jnp.inf, s)                           # drop picked

    topk_w = jnp.concatenate(vals, axis=-1)                              # (T, K)
    topk_i = jnp.concatenate(ids, axis=-1).astype(jnp.float32)           # (T, K) as f32

    if top_k > 1 and norm_topk_prob:
        dsum = jnp.sum(topk_w, axis=-1, keepdims=True) + 1e-20
        topk_w = topk_w * pl.reciprocal(dsum, approx=True)

    # Pack weights + indices into a single lane-dense 128-wide slab.
    pad_cols = pack_w - 2 * top_k
    packed = jnp.concatenate(
        [topk_w, topk_i, jnp.zeros((tile_t, pad_cols), jnp.float32)], axis=-1)
    pack_ref[...] = packed


def moe_gate_forward(hidden_states, weight, *, top_k=2, norm_topk_prob=True,
                     alpha=0.1, seq_aux=True, training=True, tile_t=512):
    """Replicates MoEGate.forward.  Returns (topk_idx, topk_weight, aux_loss)."""
    bsz, seq_len, h = hidden_states.shape
    n_experts = weight.shape[0]
    x2d = hidden_states.reshape(-1, h)
    T = x2d.shape[0]

    # Token tile: multiple of 8, capped at tile_t; pad T up to a tile multiple.
    TILE_T = min(tile_t, _round_up(T, 8))
    T_pad = _round_up(T, TILE_T)
    if T_pad != T:
        x2d = jnp.pad(x2d, ((0, T_pad - T), (0, 0)))
    num_tiles = T_pad // TILE_T

    E_pad = _round_up(n_experts, 128)     # lane-dense scores output
    PACK_W = 128                          # lane-dense packed (weights, idx) slab
    assert 2 * top_k <= PACK_W

    need_scores = bool(training) and alpha > 0.0

    kernel = functools.partial(
        _moe_gate_kernel, top_k=top_k, norm_topk_prob=norm_topk_prob,
        n_experts=n_experts, e_pad=E_pad, pack_w=PACK_W,
        emit_scores=need_scores)

    out_shapes = []
    out_specs = []
    if need_scores:
        out_shapes.append(jax.ShapeDtypeStruct((T_pad, E_pad), jnp.float32))
        out_specs.append(pl.BlockSpec((TILE_T, E_pad), lambda i: (i, 0)))
    out_shapes.append(jax.ShapeDtypeStruct((T_pad, PACK_W), jnp.float32))
    out_specs.append(pl.BlockSpec((TILE_T, PACK_W), lambda i: (i, 0)))

    outs = pl.pallas_call(
        kernel,
        out_shape=tuple(out_shapes),
        grid=(num_tiles,),
        in_specs=[
            pl.BlockSpec((TILE_T, h), lambda i: (i, 0)),       # streamed x tile
            pl.BlockSpec((n_experts, h), lambda i: (0, 0)),    # resident gate weight
        ],
        out_specs=tuple(out_specs),
        compiler_params=pltpu.CompilerParams(
            dimension_semantics=("parallel",),
            vmem_limit_bytes=48 << 20,
        ),
    )(x2d, weight)

    if need_scores:
        scores_pad, packed = outs
        scores = scores_pad[:T, :n_experts]
    else:
        (packed,) = outs
        scores = None

    topk_weight = packed[:T, :top_k]
    topk_idx = packed[:T, top_k:2 * top_k].astype(jnp.int32)

    # --- aux loss (plain-JAX glue; tiny [bsz, n_experts] bookkeeping) ---
    if need_scores:
        flat_idx = topk_idx.reshape(bsz, seq_len * top_k)
        if seq_aux:
            scores_seq = scores.reshape(bsz, seq_len, n_experts)
            ce = jnp.zeros((bsz, n_experts), jnp.float32)
            ce = ce.at[jnp.arange(bsz)[:, None], flat_idx].add(1.0)
            ce = ce / (seq_len * top_k / n_experts)
            aux_loss = jnp.mean(
                jnp.sum(ce * scores_seq.mean(axis=1), axis=1)) * alpha
        else:
            mask_ce = jax.nn.one_hot(flat_idx.reshape(-1), n_experts,
                                     dtype=jnp.float32)
            ce = mask_ce.mean(axis=0)
            Pi = scores.mean(axis=0)
            fi = ce * n_experts
            aux_loss = jnp.sum(Pi * fi) * alpha
    else:
        aux_loss = jnp.float32(0.0)

    return topk_idx, topk_weight, aux_loss


def init_gate_weight(key, n_routed_experts, gating_dim, dtype=jnp.float32):
    # torch kaiming_uniform_(a=sqrt(5)) on a (E, H) weight:
    #   gain = sqrt(2 / (1 + a^2)) = sqrt(1/3); bound = gain*sqrt(3/fan_in) = 1/sqrt(H)
    bound = 1.0 / math.sqrt(gating_dim)
    return jax.random.uniform(key, (n_routed_experts, gating_dim),
                              dtype=dtype, minval=-bound, maxval=bound)


if __name__ == "__main__":
    # small config consistent with DeciMindConfig MoE defaults
    bsz, seq_len, hidden_size = 2, 8, 32
    n_routed_experts, top_k = 4, 2

    key = jax.random.PRNGKey(0)
    kx, kw = jax.random.split(key)
    hidden_states = jax.random.normal(kx, (bsz, seq_len, hidden_size),
                                      dtype=jnp.float32)
    weight = init_gate_weight(kw, n_routed_experts, hidden_size)

    topk_idx, topk_weight, aux_loss = moe_gate_forward(
        hidden_states, weight, top_k=top_k, norm_topk_prob=True,
        alpha=0.1, seq_aux=True, training=True)

    jax.block_until_ready((topk_idx, topk_weight, aux_loss))
    assert topk_idx.shape == (bsz * seq_len, top_k)
    assert topk_weight.shape == (bsz * seq_len, top_k)

    # lightweight pure-JAX reference (loose tol: kernel uses EUP approx reciprocal)
    x2d = hidden_states.reshape(-1, hidden_size)
    ref_scores = jax.nn.softmax(x2d @ weight.T, axis=-1)
    ref_w, _ = lax.top_k(ref_scores, top_k)
    ref_w = ref_w / (jnp.sum(ref_w, axis=-1, keepdims=True) + 1e-20)
    diff = jnp.max(jnp.abs(jnp.sort(topk_weight, axis=-1)
                           - jnp.sort(ref_w, axis=-1)))
    assert float(diff) < 1e-2, f"topk_weight mismatch: {float(diff)}"

    print("KERNEL_OK")
</pallas_src>

<mosaic_0001>
module attributes {stable_mosaic.version = 11 : i64} {
  func.func @_moe_gate_kernel(%arg0: i32, %arg1: memref<16x32xf32, #tpu.memory_space<vmem>>, %arg2: memref<4x32xf32, #tpu.memory_space<vmem>>, %arg3: memref<16x128xf32, #tpu.memory_space<vmem>>, %arg4: memref<16x128xf32, #tpu.memory_space<vmem>>) attributes {dimension_semantics = [#tpu.dimension_semantics<parallel>], iteration_bounds = array<i64: 1>, scalar_prefetch = 0 : i64, scratch_operands = 0 : i64, tpu.core_type = #tpu.core_type<tc>, window_params = [{transform_indices = @transform_0, window_bounds = array<i64: 16, 32>}, {pipeline_mode = #tpu.pipeline_mode<synchronous>, transform_indices = @transform_1, window_bounds = array<i64: 4, 32>}, {transform_indices = @transform_2, window_bounds = array<i64: 16, 128>}, {transform_indices = @transform_3, window_bounds = array<i64: 16, 128>}]} {
    %c0 = arith.constant 0 : index
    %c0_0 = arith.constant 0 : index
    %0 = vector.load %arg1[%c0, %c0_0] : memref<16x32xf32, #tpu.memory_space<vmem>>, vector<16x32xf32>
    %c0_1 = arith.constant 0 : index
    %c0_2 = arith.constant 0 : index
    %1 = vector.load %arg2[%c0_1, %c0_2] : memref<4x32xf32, #tpu.memory_space<vmem>>, vector<4x32xf32>
    %cst = arith.constant dense<0.000000e+00> : vector<16x4xf32>
    %2 = tpu.matmul %0, %1, %cst {dimension_numbers = #tpu.dot_dimension_numbers<[1], [1], [0], [0], [0, 0, 1, 0], [], []>} : vector<16x32xf32>, vector<4x32xf32>, vector<16x4xf32> -> vector<16x4xf32>
    %cst_3 = arith.constant dense<0xFF800000> : vector<16xf32>
    %3 = vector.multi_reduction <maximumf>, %2, %cst_3 [1] : vector<16x4xf32> to vector<16xf32>
    %4 = vector.shape_cast %3 : vector<16xf32> to vector<16x1xf32>
    %5 = vector.broadcast %4 : vector<16x1xf32> to vector<16x4xf32>
    %6 = arith.subf %2, %5 : vector<16x4xf32>
    %7 = math.exp %6 : vector<16x4xf32>
    %cst_4 = arith.constant dense<0.000000e+00> : vector<16xf32>
    %8 = vector.multi_reduction <add>, %7, %cst_4 [1] : vector<16x4xf32> to vector<16xf32>
    %9 = vector.shape_cast %8 : vector<16xf32> to vector<16x1xf32>
    %10 = tpu.reciprocal %9 {approx = true} : vector<16x1xf32> -> vector<16x1xf32>
    %11 = vector.broadcast %10 : vector<16x1xf32> to vector<16x4xf32>
    %12 = arith.mulf %7, %11 : vector<16x4xf32>
    %cst_5 = arith.constant 0.000000e+00 : f32
    %13 = vector.broadcast %cst_5 : f32 to vector<16x124xf32>
    %14 = tpu.concatenate %12, %13 in 1 : vector<16x4xf32>, vector<16x124xf32> -> vector<16x128xf32>
    %c0_6 = arith.constant 0 : index
    %c0_7 = arith.constant 0 : index
    %15 = vector.load %arg3[%c0_6, %c0_7] : memref<16x128xf32, #tpu.memory_space<vmem>>, vector<16x128xf32>
    tpu.vector_store %arg3[%c0_6, %c0_7], %14 {strides = array<i32>} : memref<16x128xf32, #tpu.memory_space<vmem>>, vector<16x128xf32>,
    %16 = tpu.iota {dimensions = array<i32: 1>} : vector<16x4xi32>
    %cst_8 = arith.constant dense<0xFF800000> : vector<16xf32>
    %17 = vector.multi_reduction <maximumf>, %12, %cst_8 [1] : vector<16x4xf32> to vector<16xf32>
    %18 = vector.shape_cast %17 : vector<16xf32> to vector<16x1xf32>
    %19 = vector.broadcast %18 : vector<16x1xf32> to vector<16x4xf32>
    %20 = arith.cmpf oge, %12, %19 : vector<16x4xf32>
    %c4_i32 = arith.constant 4 : i32
    %21 = vector.broadcast %c4_i32 : i32 to vector<16x4xi32>
    %22 = arith.select %20, %16, %21 : vector<16x4xi1>, vector<16x4xi32>
    %cst_9 = arith.constant dense<2147483647> : vector<16xi32>
    %23 = vector.multi_reduction <minsi>, %22, %cst_9 [1] : vector<16x4xi32> to vector<16xi32>
    %24 = vector.shape_cast %23 : vector<16xi32> to vector<16x1xi32>
    %25 = vector.broadcast %24 : vector<16x1xi32> to vector<16x4xi32>
    %26 = arith.cmpi eq, %16, %25 : vector<16x4xi32>
    %cst_10 = arith.constant 0xFF800000 : f32
    %27 = vector.broadcast %cst_10 : f32 to vector<16x4xf32>
    %28 = arith.select %26, %27, %12 : vector<16x4xi1>, vector<16x4xf32>
    %cst_11 = arith.constant dense<0xFF800000> : vector<16xf32>
    %29 = vector.multi_reduction <maximumf>, %28, %cst_11 [1] : vector<16x4xf32> to vector<16xf32>
    %30 = vector.shape_cast %29 : vector<16xf32> to vector<16x1xf32>
    %31 = vector.broadcast %30 : vector<16x1xf32> to vector<16x4xf32>
    %32 = arith.cmpf oge, %28, %31 : vector<16x4xf32>
    %c4_i32_12 = arith.constant 4 : i32
    %33 = vector.broadcast %c4_i32_12 : i32 to vector<16x4xi32>
    %34 = arith.select %32, %16, %33 : vector<16x4xi1>, vector<16x4xi32>
    %cst_13 = arith.constant dense<2147483647> : vector<16xi32>
    %35 = vector.multi_reduction <minsi>, %34, %cst_13 [1] : vector<16x4xi32> to vector<16xi32>
    %36 = vector.shape_cast %35 : vector<16xi32> to vector<16x1xi32>
    %37 = tpu.concatenate %18, %30 in 1 : vector<16x1xf32>, vector<16x1xf32> -> vector<16x2xf32>
    %38 = tpu.concatenate %24, %36 in 1 : vector<16x1xi32>, vector<16x1xi32> -> vector<16x2xi32>
    %39 = arith.sitofp %38 : vector<16x2xi32> to vector<16x2xf32>
    %cst_14 = arith.constant dense<0.000000e+00> : vector<16xf32>
    %40 = vector.multi_reduction <add>, %37, %cst_14 [1] : vector<16x2xf32> to vector<16xf32>
    %41 = vector.shape_cast %40 : vector<16xf32> to vector<16x1xf32>
    %cst_15 = arith.constant 9.99999968E-21 : f32
    %42 = vector.broadcast %cst_15 : f32 to vector<16x1xf32>
    %43 = arith.addf %41, %42 : vector<16x1xf32>
    %44 = tpu.reciprocal %43 {approx = true} : vector<16x1xf32> -> vector<16x1xf32>
    %45 = vector.broadcast %44 : vector<16x1xf32> to vector<16x2xf32>
    %46 = arith.mulf %37, %45 : vector<16x2xf32>
    %cst_16 = arith.constant 0.000000e+00 : f32
    %47 = vector.broadcast %cst_16 : f32 to vector<16x124xf32>
    %48 = tpu.concatenate %46, %39, %47 in 1 : vector<16x2xf32>, vector<16x2xf32>, vector<16x124xf32> -> vector<16x128xf32>
    %c0_17 = arith.constant 0 : index
    %c0_18 = arith.constant 0 : index
    %49 = vector.load %arg4[%c0_17, %c0_18] : memref<16x128xf32, #tpu.memory_space<vmem>>, vector<16x128xf32>
    tpu.vector_store %arg4[%c0_17, %c0_18], %48 {strides = array<i32>} : memref<16x128xf32, #tpu.memory_space<vmem>>, vector<16x128xf32>,
    return
  }
  func.func @transform_0(%arg0: i32) -> (i32, i32) {
    %c0_i32 = arith.constant 0 : i32
    %c0_i32_0 = arith.constant 0 : i32
    return %arg0, %c0_i32 : i32, i32
  }
  func.func @transform_1(%arg0: i32) -> (i32, i32) {
    %c0_i32 = arith.constant 0 : i32
    %c0_i32_0 = arith.constant 0 : i32
    %c0_i32_1 = arith.constant 0 : i32
    return %c0_i32, %c0_i32_0 : i32, i32
  }
  func.func @transform_2(%arg0: i32) -> (i32, i32) {
    %c0_i32 = arith.constant 0 : i32
    %c0_i32_0 = arith.constant 0 : i32
    return %arg0, %c0_i32 : i32, i32
  }
  func.func @transform_3(%arg0: i32) -> (i32, i32) {
    %c0_i32 = arith.constant 0 : i32
    %c0_i32_0 = arith.constant 0 : i32
    return %arg0, %c0_i32 : i32, i32
  }
}

</mosaic_0001>

<llo_original>
// kernel: tpu_custom_call.1
$region0: #{tpu_custom_call.1}
  #allocation0 [shape = 'u32[]', space=smem, size = 0x4, offset = 0x4, fixed_abs, tag = 'smem constant byte address 0x4 - core index']
  #allocation1 [shape = 'u32[144,128]{1,0:T(1,128)}', space=vmem, size = 0x12000, scoped, tag = 'internal scratch']
  %s0 = inlined_call_operand.hbm [shape: f32[16,32], index: 0, kind: input, shape index: {}]
  %s1 = inlined_call_operand.hbm [shape: f32[4,32], index: 1, kind: input, shape index: {}]
  %s2 = inlined_call_operand.hbm [shape: f32[16,128], index: 2, kind: output, shape index: {0}]
  %s3 = inlined_call_operand.hbm [shape: f32[16,128], index: 3, kind: output, shape index: {1}]
  %4 = xla_tuple %s2, %s3
  %s5 = sld [smem:[#allocation0]]
  $region34: #{tpu_custom_call.1} parent=0
    _
  %s7 = ssub.s32 1, %s5
  %s8 = scalar_select 0, %s7, %s5
  $region1: #{tpu_custom_call.1} parent=0
    #allocation2 [shape = 'u8[8192]{0}', space=vmem, size = 0x2000, scoped, tag = 'input window, operand 0, single buffered']
    #allocation3 [shape = 's32[1]{0}', space=sflag, size = 0x4, scoped, tag = 'scoped memory for tpu_custom_call.1']
    #allocation4 [shape = 's32[1]{0}', space=sflag, size = 0x4, scoped, tag = 'scoped memory for tpu_custom_call.1']
    #allocation5 [shape = 'u8[2048]{0}', space=vmem, size = 0x800, scoped, tag = 'input window, operand 1, single buffered']
    #allocation6 [shape = 's32[1]{0}', space=sflag, size = 0x4, scoped, tag = 'scoped memory for tpu_custom_call.1']
    #allocation7 [shape = 'u8[8192]{0}', space=vmem, size = 0x2000, scoped, tag = 'output window, operand 0, single buffered']
    #allocation8 [shape = 'u8[8192]{0}', space=vmem, size = 0x2000, scoped, tag = 'output window, operand 1, single buffered']
    #allocation9 [shape = 's32[1]{0}', space=sflag, size = 0x4, scoped, tag = 'scoped memory for tpu_custom_call.1']
    %9 = vsyncpa [#allocation3], 0
    %10 = vsyncpa [#allocation6], 0
    %11 = vsyncpa [#allocation4], 0
    %12 = vsyncpa [#allocation9], 0
    // Predicated region
    $region2: #{tpu_custom_call.1} parent=1 // pred_check
      _
    $region3: #{tpu_custom_call.1} parent=1 // pred_check_branch
      %14 = sbr.rel (0) target = $region5
    $region4: #{tpu_custom_call.1} parent=1 // pred_region
      %s16 = ssub.s32 256, 256
      %17 = vsyncadd [#allocation3], %s16
      %s18 = sshll.u32 [#allocation2], 4
      %s19 = int_to_ptr.vmem [resolvable:$true] %s18
      %24 = dma.hbm_to_vmem [thread:$0]  %s0, 256, %s19, [#allocation3], 128, 128, 8
    $region5: #{tpu_custom_call.1} parent=1 // pred_fallthru
      _
    // Predicated region
    $region6: #{tpu_custom_call.1} parent=1 // pred_check
      _
    $region7: #{tpu_custom_call.1} parent=1 // pred_check_branch
      %26 = sbr.rel (0) target = $region9
    $region8: #{tpu_custom_call.1} parent=1 // pred_region
      %s28 = ssub.s32 64, 64
      %29 = vsyncadd [#allocation6], %s28
      %s31 = sshll.u32 [#allocation5], 4
      %s32 = int_to_ptr.vmem [resolvable:$true] %s31
      %34 = dma.hbm_to_vmem [thread:$0]  %s1, 64, %s32, [#allocation6]
    $region9: #{tpu_custom_call.1} parent=1 // pred_fallthru
      _
    // Predicated region
    $region10: #{tpu_custom_call.1} parent=1 // pred_check
      _
    $region11: #{tpu_custom_call.1} parent=1 // pred_check_branch
      %36 = sbr.rel (0) target = $region13
    $region12: #{tpu_custom_call.1} parent=1 // pred_region
      %37 = dma.done [#allocation3], 256
    $region13: #{tpu_custom_call.1} parent=1 // pred_fallthru
      _
    // Predicated region
    $region14: #{tpu_custom_call.1} parent=1 // pred_check
      _
    $region15: #{tpu_custom_call.1} parent=1 // pred_check_branch
      %39 = sbr.rel (0) target = $region17
    $region16: #{tpu_custom_call.1} parent=1 // pred_region
      %40 = dma.done [#allocation6], 64
    $region17: #{tpu_custom_call.1} parent=1 // pred_fallthru
      _
    %v41 = vld [vmem:[#allocation2] sm:$0xff]
    %v42 = vld [vmem:[#allocation2 + $0x8] sm:$0xff]
    %v43 = vld [vmem:[#allocation5] sm:$0xf]
    %vm44 = vcmask 261120
    %v46 = vsel %vm44, %v41, 0
    %v49 = vsel %vm44, %v42, 0
    %v52 = vsel %vm44, %v43, 0
    %54 = vmatprep.subr.mxu0 0.0
    %55 = vmatpush1.xpose.msra.mxu0 %v52
    %56 = vmatprep.subr.mxu0 0.0
    %57 = vmatpush1.xpose.msra.mxu0 0.0
    %58 = vmatprep.subr.mxu0 0.0
    %59 = vmatpush1.xpose.msra.mxu0 0.0
    %60 = vmatprep.subr.mxu0 0.0
    %61 = vmatpush1.xpose.msra.mxu0 0.0
    %62 = vmatprep.subr.mxu0 0.0
    %63 = vmatpush1.xpose.msra.mxu0 0.0
    %64 = vmatprep.subr.mxu0 0.0
    %65 = vmatpush1.xpose.msra.mxu0 0.0
    %66 = vmatprep.subr.mxu0 0.0
    %67 = vmatpush1.xpose.msra.mxu0 0.0
    %68 = vmatprep.subr.mxu0 0.0
    %69 = vmatpush1.xpose.msra.mxu0 0.0
    %70 = vmatprep.subr.mxu0 0.0
    %71 = vmatpush1.xpose.msra.mxu0 0.0
    %72 = vmatprep.subr.mxu0 0.0
    %73 = vmatpush1.xpose.msra.mxu0 0.0
    %74 = vmatprep.subr.mxu0 0.0
    %75 = vmatpush1.xpose.msra.mxu0 0.0
    %76 = vmatprep.subr.mxu0 0.0
    %77 = vmatpush1.xpose.msra.mxu0 0.0
    %78 = vmatprep.subr.mxu0 0.0
    %79 = vmatpush1.xpose.msra.mxu0 0.0
    %80 = vmatprep.subr.mxu0 0.0
    %81 = vmatpush1.xpose.msra.mxu0 0.0
    %82 = vmatprep.subr.mxu0 0.0
    %83 = vmatpush1.xpose.msra.mxu0 0.0
    %84 = vmatprep.subr.mxu0 0.0
    %85 = vmatpush1.xpose.msra.mxu0 0.0
    %86 = vmatprep.subr.mxu0 0.0
    %87 = vmatpush1.xpose.msra.mxu0 0.0
    %88 = vmatprep.subr.mxu0 0.0
    %89 = vmatpush1.xpose.msra.mxu0 0.0
    %90 = vmatprep.subr.mxu0 0.0
    %91 = vmatpush1.xpose.msra.mxu0 0.0
    %92 = vmatprep.subr.mxu0 0.0
    %93 = vmatpush1.xpose.msra.mxu0 0.0
    %94 = vmatprep.subr.mxu0 0.0
    %95 = vmatpush1.xpose.msra.mxu0 0.0
    %96 = vmatprep.subr.mxu0 0.0
    %97 = vmatpush1.xpose.msra.mxu0 0.0
    %98 = vmatprep.subr.mxu0 0.0
    %99 = vmatpush1.xpose.msra.mxu0 0.0
    %100 = vmatprep.subr.mxu0 0.0
    %101 = vmatpush1.xpose.msra.mxu0 0.0
    %102 = vmatprep.subr.mxu0 0.0
    %103 = vmatpush1.xpose.msra.mxu0 0.0
    %104 = vmatprep.subr.mxu0 0.0
    %105 = vmatpush1.xpose.msra.mxu0 0.0
    %106 = vmatprep.subr.mxu0 0.0
    %107 = vmatpush1.xpose.msra.mxu0 0.0
    %108 = vmatprep.subr.mxu0 0.0
    %109 = vmatpush1.xpose.msra.mxu0 0.0
    %110 = vmatprep.subr.mxu0 0.0
    %111 = vmatpush1.xpose.msra.mxu0 0.0
    %112 = vmatprep.subr.mxu0 0.0
    %113 = vmatpush1.xpose.msra.mxu0 0.0
    %114 = vmatprep.subr.mxu0 0.0
    %115 = vmatpush1.xpose.msra.mxu0 0.0
    %116 = vmatprep.subr.mxu0 0.0
    %117 = vmatpush1.xpose.msra.mxu0 0.0
    %118 = vmatprep.mubr.f32.mxu0 0.0
    %119 = vmatmul.mubr.f32.gmra.mrb[0].mxu0 %v46
    %v120 = vpop.f32.mrb[0].mxu0
    %v121 = vadd.f32 0.0, %v120
    %v122 = vpop.f32.mrb[0].mxu0
    %123 = vmatprep.mubr.f32.mxu0 0.0
    %124 = vmatmul.mubr.f32.gmra.mrb[0].mxu0 %v49
    %v125 = vpop.f32.mrb[0].mxu0
    %v126 = vadd.f32 0.0, %v125
    %v127 = vpop.f32.mrb[0].mxu0
    %128 = vdwg.mxu0
    %vm129 = vcmask 31744
    %v130 = vsel %vm129, %v121, -inf
    %131 = vmax.xlane.f32.xlu0 %v130
    %v132 = vpop.xlane.xlu0 %131
    %v133 = vsel %vm129, %v126, -inf
    %134 = vmax.xlane.f32.xlu0 %v133
    %v135 = vpop.xlane.xlu0 %134
    %v136 = vsub.f32 %v121, %v132
    %v137 = vsub.f32 %v126, %v135
    %v138 = vmul.f32 %v136, 1.442695
    %v139 = vpow.pop %v138
    %v140 = vmul.f32 %v137, 1.442695
    %v141 = vpow.pop %v140
    %v142 = vsel %vm129, %v139, 0.0
    %143 = vadd.xlane.f32.xlu0 %v142
    %v144 = vpop.xlane.xlu0 %143
    %v145 = vsel %vm129, %v141, 0.0
    %146 = vadd.xlane.f32.xlu0 %v145
    %v147 = vpop.xlane.xlu0 %146
    %v148 = vrcp.pop %v144
    %v149 = vrcp.pop %v147
    %v150 = vmul.f32 %v139, %v148
    %v151 = vmul.f32 %v141, %v149
    %v152 = vsel %vm129, %v150, 0.0
    %v153 = vsel %vm129, %v151, 0.0
    %154 = vst [vmem:[#allocation7] sm:$0xff] %v152
    %155 = vst [vmem:[#allocation7 + $0x8] sm:$0xff] %v153
    %v156 = vlaneseq
    %v157 = vand.u32 %v156, 127
    %v158 = vsel %vm129, %v150, -inf
    %159 = vmax.xlane.f32.xlu0 %v158
    %v160 = vpop.xlane.xlu0 %159
    %v161 = vsel %vm129, %v151, -inf
    %162 = vmax.xlane.f32.xlu0 %v161
    %v163 = vpop.xlane.xlu0 %162
    %vm164 = vcmp.ge.f32.partialorder %v150, %v160
    %vm165 = vcmp.ge.f32.partialorder %v151, %v163
    %v166 = vsel %vm164, %v157, 4
    %v167 = vsel %vm165, %v157, 4
    %v168 = vsel %vm129, %v166, 2147483647
    %v169 = vand.u32 %v168, 65535
    %v170 = vshra.s32 %v168, 16
    %v171 = vcvt.s32.f32 %v169
    %v172 = vcvt.s32.f32 %v170
    %173 = vmin.xlane.f32.xlu0 %v172
    %v174 = vpop.xlane.xlu0 %173
    %vm175 = vcmp.eq.f32.partialorder %v172, %v174
    %v176 = vsel %vm175, %v171, inf
    %177 = vmin.xlane.f32.xlu0 %v176
    %v178 = vpop.xlane.xlu0 %177
    %v179 = vcvt.f32.s32 %v178
    %v180 = vcvt.f32.s32 %v174
    %v181 = vshll.u32 %v180, 16
    %v182 = vadd.s32 %v181, %v179
    %v183 = vsel %vm129, %v167, 2147483647
    %v184 = vand.u32 %v183, 65535
    %v185 = vshra.s32 %v183, 16
    %v186 = vcvt.s32.f32 %v184
    %v187 = vcvt.s32.f32 %v185
    %188 = vmin.xlane.f32.xlu0 %v187
    %v189 = vpop.xlane.xlu0 %188
    %vm190 = vcmp.eq.f32.partialorder %v187, %v189
    %v191 = vsel %vm190, %v186, inf
    %192 = vmin.xlane.f32.xlu0 %v191
    %v193 = vpop.xlane.xlu0 %192
    %v194 = vcvt.f32.s32 %v193
    %v195 = vcvt.f32.s32 %v189
    %v196 = vshll.u32 %v195, 16
    %v197 = vadd.s32 %v196, %v194
    %vm198 = vcmp.eq.s32.totalorder %v157, %v182
    %vm199 = vcmp.eq.s32.totalorder %v157, %v197
    %v200 = vsel %vm198, -inf, %v150
    %v201 = vsel %vm199, -inf, %v151
    %v202 = vsel %vm129, %v200, -inf
    %203 = vmax.xlane.f32.xlu0 %v202
    %v204 = vpop.xlane.xlu0 %203
    %v205 = vsel %vm129, %v201, -inf
    %206 = vmax.xlane.f32.xlu0 %v205
    %v207 = vpop.xlane.xlu0 %206
    %vm208 = vcmp.ge.f32.partialorder %v200, %v204
    %vm209 = vcmp.ge.f32.partialorder %v201, %v207
    %v210 = vsel %vm208, %v157, 4
    %v211 = vsel %vm209, %v157, 4
    %v212 = vsel %vm129, %v210, 2147483647
    %v213 = vand.u32 %v212, 65535
    %v214 = vshra.s32 %v212, 16
    %v215 = vcvt.s32.f32 %v213
    %v216 = vcvt.s32.f32 %v214
    %217 = vmin.xlane.f32.xlu0 %v216
    %v218 = vpop.xlane.xlu0 %217
    %vm219 = vcmp.eq.f32.partialorder %v216, %v218
    %v220 = vsel %vm219, %v215, inf
    %221 = vmin.xlane.f32.xlu0 %v220
    %v222 = vpop.xlane.xlu0 %221
    %v223 = vcvt.f32.s32 %v222
    %v224 = vcvt.f32.s32 %v218
    %v225 = vshll.u32 %v224, 16
    %v226 = vadd.s32 %v225, %v223
    %v227 = vsel %vm129, %v211, 2147483647
    %v228 = vand.u32 %v227, 65535
    %v229 = vshra.s32 %v227, 16
    %v230 = vcvt.s32.f32 %v228
    %v231 = vcvt.s32.f32 %v229
    %232 = vmin.xlane.f32.xlu0 %v231
    %v233 = vpop.xlane.xlu0 %232
    %vm234 = vcmp.eq.f32.partialorder %v231, %v233
    %v235 = vsel %vm234, %v230, inf
    %236 = vmin.xlane.f32.xlu0 %v235
    %v237 = vpop.xlane.xlu0 %236
    %v238 = vcvt.f32.s32 %v237
    %v239 = vcvt.f32.s32 %v233
    %v240 = vshll.u32 %v239, 16
    %v241 = vadd.s32 %v240, %v238
    %vm242 = vcmask 7168
    %v243 = vsel %vm242, %v160, %v204
    %v244 = vsel %vm242, %v163, %v207
    %v245 = vsel %vm242, %v182, %v226
    %v246 = vsel %vm242, %v197, %v241
    %v247 = vcvt.s32.f32 %v245
    %v248 = vcvt.s32.f32 %v246
    %vm249 = vcmask 15360
    %v250 = vsel %vm249, %v243, 0.0
    %251 = vadd.xlane.f32.xlu0 %v250
    %v252 = vpop.xlane.xlu0 %251
    %v253 = vsel %vm249, %v244, 0.0
    %254 = vadd.xlane.f32.xlu0 %v253
    %v255 = vpop.xlane.xlu0 %254
    %v256 = vadd.f32 %v252, 1e-20
    %v257 = vadd.f32 %v255, 1e-20
    %v258 = vrcp.pop %v256
    %v259 = vrcp.pop %v257
    %v260 = vmul.f32 %v243, %v258
    %v261 = vmul.f32 %v244, %v259
    %264 = vrot.lane.b32.xlu0 %v247, 2
    %v265 = vpop.permute.xlu0 %264
    %266 = vrot.lane.b32.xlu0 %v248, 2
    %v267 = vpop.permute.xlu0 %266
    %v270 = vsel %vm249, %v260, %v265
    %v271 = vsel %vm249, %v261, %v267
    %v272 = vsel %vm129, %v270, 0.0
    %v273 = vsel %vm129, %v271, 0.0
    %274 = vst [vmem:[#allocation8] sm:$0xff] %v272
    %275 = vst [vmem:[#allocation8 + $0x8] sm:$0xff] %v273
    // Predicated region
    $region18: #{tpu_custom_call.1} parent=1 // pred_check
      _
    $region19: #{tpu_custom_call.1} parent=1 // pred_check_branch
      %277 = sbr.rel (0) target = $region21
    $region20: #{tpu_custom_call.1} parent=1 // pred_region
      %s279 = ssub.s32 256, 256
      %280 = vsyncadd [#allocation4], %s279
      %s281 = sshll.u32 [#allocation7], 4
      %s282 = int_to_ptr.vmem [resolvable:$true] %s281
      %287 = dma.vmem_to_hbm [thread:$0]  %s282, 256, %s2, [#allocation4], 128, 128, 8
    $region21: #{tpu_custom_call.1} parent=1 // pred_fallthru
      _
    // Predicated region
    $region22: #{tpu_custom_call.1} parent=1 // pred_check
      _
    $region23: #{tpu_custom_call.1} parent=1 // pred_check_branch
      %289 = sbr.rel (0) target = $region25
    $region24: #{tpu_custom_call.1} parent=1 // pred_region
      %s291 = ssub.s32 256, 256
      %292 = vsyncadd [#allocation9], %s291
      %s293 = sshll.u32 [#allocation8], 4
      %s294 = int_to_ptr.vmem [resolvable:$true] %s293
      %299 = dma.vmem_to_hbm [thread:$0]  %s294, 256, %s3, [#allocation9], 128, 128, 8
    $region25: #{tpu_custom_call.1} parent=1 // pred_fallthru
      _
    // Predicated region
    $region26: #{tpu_custom_call.1} parent=1 // pred_check
      _
    $region27: #{tpu_custom_call.1} parent=1 // pred_check_branch
      %301 = sbr.rel (0) target = $region29
    $region28: #{tpu_custom_call.1} parent=1 // pred_region
      %302 = dma.done [#allocation4], 256
    $region29: #{tpu_custom_call.1} parent=1 // pred_fallthru
      _
    // Predicated region
    $region30: #{tpu_custom_call.1} parent=1 // pred_check
      _
    $region31: #{tpu_custom_call.1} parent=1 // pred_check_branch
      %304 = sbr.rel (0) target = $region33
    $region32: #{tpu_custom_call.1} parent=1 // pred_region
      %305 = dma.done [#allocation9], 256
    $region33: #{tpu_custom_call.1} parent=1 // pred_fallthru
      _
    %306 = vsyncpa [#allocation3], 1
    %307 = vsyncpa [#allocation6], 1
    %308 = vsyncpa [#allocation4], 1
    %309 = vsyncpa [#allocation9], 1

</llo_original>
